<compile_context>
chip_gen: v7x
topology: tpu7x:2x2x1
jax: 0.10.0
libtpu: 0.0.40
codegen_flags: <defaults>
</compile_context>

<pallas_src>
import functools

import jax
import jax.numpy as jnp
from jax.experimental import pallas as pl
from jax.experimental.pallas import tpu as pltpu


def _linear_kernel(x_ref, wt_ref, b_ref, o_ref, acc_ref):
    # x_ref: (tm, tk)   wt_ref: (tk, tn)   b_ref: (1, tn)
    # o_ref: (tm, tn)   acc_ref: (tm, tn) f32 scratch, resident across K steps.
    k = pl.program_id(2)

    @pl.when(k == 0)
    def _init():
        acc_ref[...] = jnp.zeros_like(acc_ref)

    # Standard (M,K)x(K,N) contraction: both operands feed the MXU directly.
    acc_ref[...] += jnp.dot(
        x_ref[...], wt_ref[...], preferred_element_type=jnp.float32
    )

    @pl.when(k == pl.num_programs(2) - 1)
    def _finalize():
        o_ref[...] = (
            acc_ref[...] + b_ref[...].astype(jnp.float32)
        ).astype(o_ref.dtype)


def _round_up(x, m):
    return (x + m - 1) // m * m


def _pick_tile(dim, unit, cap):
    """Choose (tile, padded_dim) for one dimension.

    * dim <= cap: a single full-extent block (Pallas allows a block dim equal
      to the full array dim even when not (8,128)-aligned) -> zero padding,
      zero wasted FLOPs, one grid step along this axis.
    * dim  > cap: pick a `unit`-multiple tile <= cap that minimizes padding,
      preferring the largest such tile (fewer grid steps, bigger DMAs).
    """
    cap = max(cap, unit)
    if dim <= cap:
        return dim, dim
    best_t, best_pad = unit, _round_up(dim, unit)
    t = unit
    while t <= cap:
        pad = _round_up(dim, t)
        if pad < best_pad or (pad == best_pad and t > best_t):
            best_t, best_pad = t, pad
        t += unit
    return best_t, best_pad


@functools.partial(jax.jit, static_argnames=("tm", "tn", "tk"))
def linear_forward(x, weight_t, bias, *, tm=None, tn=None, tk=None):
    """y = x @ weight.T + bias.

    x:        (..., IN)
    weight_t: (IN, OUT)  -- the nn.Linear weight, transposed ONCE outside the
                            hot path (see the `Linear` wrapper class below).
    bias:     (OUT,)
    """
    lead_shape = x.shape[:-1]
    IN = x.shape[-1]
    IN_w, OUT = weight_t.shape
    assert IN == IN_w, "weight_t.shape[0] must equal x.shape[-1]"

    x2 = x.reshape(-1, IN)
    B = x2.shape[0]

    dtype = x.dtype
    itemsize = jnp.dtype(dtype).itemsize
    sublane = 8 * (4 // itemsize)  # 8 for f32, 16 for bf16

    # Tile caps sized for v7x (64 MiB physical VMEM -- the tightest gen):
    # worst case f32 (tm=256, tn=512, tk=2048) keeps double-buffered inputs +
    # output + f32 accumulator around ~15 MiB, far under the limit below while
    # still feeding the 256-wide MXU and amortizing per-step overhead.
    TM_CAP = 256
    TN_CAP = 512
    TK_CAP = 2048 * (4 // itemsize)  # larger K tiles for narrow dtypes

    if tm is None:
        tm, Bp = _pick_tile(B, sublane, TM_CAP)
    else:
        Bp = _round_up(B, tm)
    if tn is None:
        tn, Np = _pick_tile(OUT, 128, TN_CAP)
    else:
        Np = _round_up(OUT, tn)
    if tk is None:
        tk, Kp = _pick_tile(IN, 128, TK_CAP)
    else:
        Kp = _round_up(IN, tk)

    # Padding fallback -- with the tile picker above this is a no-op for all
    # shapes whose dims either fit a single tile or divide into 128-multiples.
    xp = x2 if (Bp == B and Kp == IN) else jnp.pad(
        x2, ((0, Bp - B), (0, Kp - IN)))
    wtp = weight_t if (Kp == IN and Np == OUT) else jnp.pad(
        weight_t, ((0, Kp - IN), (0, Np - OUT)))
    bp = (bias if Np == OUT else jnp.pad(bias, (0, Np - OUT))).reshape(1, Np)

    grid = (Bp // tm, Np // tn, Kp // tk)
    gm, gn, gk = grid

    # Explicit scoped-VMEM budget: >= 32 MiB (above v5e's 16 MiB default so
    # large tiles are accepted), capped at 48 MiB (safe under v7x's 64 MiB
    # physical VMEM per TensorCore).
    vmem_needed = (
        2 * (tm * tk + tk * tn) * itemsize   # double-buffered x / weight tiles
        + 2 * tm * tn * itemsize             # double-buffered output tile
        + tm * tn * 4                        # f32 accumulator scratch
        + 2 * tn * itemsize                  # bias tile
    )
    vmem_limit = min(48 << 20, max(32 << 20, int(vmem_needed * 1.5)))

    # Advisory cost estimate, accounting for grid re-reads: x is streamed once
    # per N tile, the weight once per M tile.
    cost = pl.CostEstimate(
        flops=2 * Bp * Np * Kp,
        transcendentals=0,
        bytes_accessed=(
            Bp * Kp * itemsize * gn          # x re-read per N tile
            + Kp * Np * itemsize * gm        # weight re-read per M tile
            + Np * itemsize * gm             # bias
            + Bp * Np * itemsize             # output write
        ),
    )

    y_pad = pl.pallas_call(
        _linear_kernel,
        out_shape=jax.ShapeDtypeStruct((Bp, Np), dtype),
        grid_spec=pltpu.PrefetchScalarGridSpec(
            num_scalar_prefetch=0,
            grid=grid,
            in_specs=[
                pl.BlockSpec((tm, tk), lambda i, j, k: (i, k)),  # x tile
                pl.BlockSpec((tk, tn), lambda i, j, k: (k, j)),  # weight.T tile
                pl.BlockSpec((1, tn), lambda i, j, k: (0, j)),   # bias tile
            ],
            out_specs=pl.BlockSpec((tm, tn), lambda i, j, k: (i, j)),
            scratch_shapes=[pltpu.VMEM((tm, tn), jnp.float32)],
        ),
        compiler_params=pltpu.CompilerParams(
            dimension_semantics=("parallel", "parallel", "arbitrary"),
            vmem_limit_bytes=vmem_limit,
        ),
        cost_estimate=cost,
    )(xp, wtp, bp)

    if Bp != B or Np != OUT:
        y_pad = y_pad[:B, :OUT]
    return y_pad.reshape(*lead_shape, OUT)


class Linear:
    """Pallas-backed equivalent of the PyTorch module `Linear(input, output)`."""

    def __init__(self, key, in_features, out_features, dtype=jnp.float32):
        kw, kb = jax.random.split(key)
        bound = 1.0 / (in_features ** 0.5)  # PyTorch nn.Linear default init
        self.weight = jax.random.uniform(
            kw, (out_features, in_features), dtype, -bound, bound)
        self.bias = jax.random.uniform(
            kb, (out_features,), dtype, -bound, bound)
        # One-time transpose OUTSIDE the hot path: the kernel consumes the
        # weight as (IN, OUT), so no per-call HBM transpose and no per-K-step
        # tile transpose in the kernel.  Amortizes to ~0 across forward calls.
        self.weight_t = jnp.asarray(self.weight.T)

    def __call__(self, x):
        return linear_forward(x, self.weight_t, self.bias)


if __name__ == "__main__":
    key = jax.random.PRNGKey(0)
    k_mod, k_x, k_mod2, k_x2 = jax.random.split(key, 4)

    # --- small shapes, consistent with nn.Linear(input=32, output=16) -------
    B, IN, OUT = 8, 32, 16
    mod = Linear(k_mod, IN, OUT)
    x = jax.random.normal(k_x, (B, IN), jnp.float32)

    y = jax.block_until_ready(mod(x))
    y_ref = x @ mod.weight.T + mod.bias
    assert y.shape == (B, OUT)
    assert jnp.allclose(y, y_ref, atol=1e-5, rtol=1e-5)

    # --- modest multi-tile shapes: IN=2560 -> tk=1280 (2 K steps, exercises
    #     the resident-accumulator reduction), OUT=768 -> tn=384 (2 N tiles),
    #     B=96 -> single full-extent M block.  Zero padding anywhere. ---------
    B2, IN2, OUT2 = 96, 2560, 768
    mod2 = Linear(k_mod2, IN2, OUT2)
    x2 = jax.random.normal(k_x2, (B2, IN2), jnp.float32)

    y2 = jax.block_until_ready(mod2(x2))
    y2_ref = x2 @ mod2.weight.T + mod2.bias
    assert y2.shape == (B2, OUT2)
    rel_err = jnp.linalg.norm(y2 - y2_ref) / jnp.linalg.norm(y2_ref)
    assert rel_err < 1e-2, float(rel_err)

    print("KERNEL_OK")
</pallas_src>

<mosaic_0001>
module attributes {stable_mosaic.version = 11 : i64} {
  func.func @_linear_kernel(%arg0: i32, %arg1: i32, %arg2: i32, %arg3: memref<8x32xf32, #tpu.memory_space<vmem>>, %arg4: memref<32x16xf32, #tpu.memory_space<vmem>>, %arg5: memref<1x16xf32, #tpu.memory_space<vmem>>, %arg6: memref<8x16xf32, #tpu.memory_space<vmem>>, %arg7: memref<8x16xf32, #tpu.memory_space<vmem>>) attributes {dimension_semantics = [#tpu.dimension_semantics<parallel>, #tpu.dimension_semantics<parallel>, #tpu.dimension_semantics<arbitrary>], iteration_bounds = array<i64: 1, 1, 1>, scalar_prefetch = 0 : i64, scratch_operands = 1 : i64, tpu.core_type = #tpu.core_type<tc>, window_params = [{transform_indices = @transform_0, window_bounds = array<i64: 8, 32>}, {transform_indices = @transform_1, window_bounds = array<i64: 32, 16>}, {transform_indices = @transform_2, window_bounds = array<i64: 1, 16>}, {transform_indices = @transform_3, window_bounds = array<i64: 8, 16>}]} {
    %c0_i32 = arith.constant 0 : i32
    %0 = arith.cmpi eq, %arg2, %c0_i32 : i32
    %1 = arith.extui %0 : i1 to i32
    %c0_i32_0 = arith.constant 0 : i32
    %2 = arith.cmpi ne, %1, %c0_i32_0 : i32
    scf.if %2 {
      %cst_10 = arith.constant 0.000000e+00 : f32
      %12 = vector.broadcast %cst_10 : f32 to vector<8x16xf32>
      %c0_11 = arith.constant 0 : index
      %c0_12 = arith.constant 0 : index
      %13 = vector.load %arg7[%c0_11, %c0_12] : memref<8x16xf32, #tpu.memory_space<vmem>>, vector<8x16xf32>
      tpu.vector_store %arg7[%c0_11, %c0_12], %12 {strides = array<i32>} : memref<8x16xf32, #tpu.memory_space<vmem>>, vector<8x16xf32>,
    } else {
    }
    %c0 = arith.constant 0 : index
    %c0_1 = arith.constant 0 : index
    %3 = vector.load %arg7[%c0, %c0_1] : memref<8x16xf32, #tpu.memory_space<vmem>>, vector<8x16xf32>
    %c0_2 = arith.constant 0 : index
    %c0_3 = arith.constant 0 : index
    %4 = vector.load %arg3[%c0_2, %c0_3] : memref<8x32xf32, #tpu.memory_space<vmem>>, vector<8x32xf32>
    %c0_4 = arith.constant 0 : index
    %c0_5 = arith.constant 0 : index
    %5 = vector.load %arg4[%c0_4, %c0_5] : memref<32x16xf32, #tpu.memory_space<vmem>>, vector<32x16xf32>
    %cst = arith.constant dense<0.000000e+00> : vector<8x16xf32>
    %6 = tpu.matmul %4, %5, %cst {dimension_numbers = #tpu.dot_dimension_numbers<[1], [0], [0], [1], [0, 0, 1, 1], [], []>} : vector<8x32xf32>, vector<32x16xf32>, vector<8x16xf32> -> vector<8x16xf32>
    %7 = arith.addf %3, %6 : vector<8x16xf32>
    %c0_6 = arith.constant 0 : index
    %c0_7 = arith.constant 0 : index
    %8 = vector.load %arg7[%c0_6, %c0_7] : memref<8x16xf32, #tpu.memory_space<vmem>>, vector<8x16xf32>
    tpu.vector_store %arg7[%c0_6, %c0_7], %7 {strides = array<i32>} : memref<8x16xf32, #tpu.memory_space<vmem>>, vector<8x16xf32>,
    %c0_i32_8 = arith.constant 0 : i32
    %9 = arith.cmpi eq, %arg2, %c0_i32_8 : i32
    %10 = arith.extui %9 : i1 to i32
    %c0_i32_9 = arith.constant 0 : i32
    %11 = arith.cmpi ne, %10, %c0_i32_9 : i32
    scf.if %11 {
      %c0_10 = arith.constant 0 : index
      %c0_11 = arith.constant 0 : index
      %12 = vector.load %arg7[%c0_10, %c0_11] : memref<8x16xf32, #tpu.memory_space<vmem>>, vector<8x16xf32>
      %c0_12 = arith.constant 0 : index
      %c0_13 = arith.constant 0 : index
      %13 = vector.load %arg5[%c0_12, %c0_13] : memref<1x16xf32, #tpu.memory_space<vmem>>, vector<1x16xf32>
      %14 = vector.broadcast %13 : vector<1x16xf32> to vector<8x16xf32>
      %15 = arith.addf %12, %14 : vector<8x16xf32>
      %c0_14 = arith.constant 0 : index
      %c0_15 = arith.constant 0 : index
      %16 = vector.load %arg6[%c0_14, %c0_15] : memref<8x16xf32, #tpu.memory_space<vmem>>, vector<8x16xf32>
      tpu.vector_store %arg6[%c0_14, %c0_15], %15 {strides = array<i32>} : memref<8x16xf32, #tpu.memory_space<vmem>>, vector<8x16xf32>,
    } else {
    }
    return
  }
  func.func @transform_0(%arg0: i32, %arg1: i32, %arg2: i32) -> (i32, i32) {
    %c0_i32 = arith.constant 0 : i32
    return %arg0, %arg2 : i32, i32
  }
  func.func @transform_1(%arg0: i32, %arg1: i32, %arg2: i32) -> (i32, i32) {
    %c0_i32 = arith.constant 0 : i32
    return %arg2, %arg1 : i32, i32
  }
  func.func @transform_2(%arg0: i32, %arg1: i32, %arg2: i32) -> (i32, i32) {
    %c0_i32 = arith.constant 0 : i32
    %c0_i32_0 = arith.constant 0 : i32
    return %c0_i32, %arg1 : i32, i32
  }
  func.func @transform_3(%arg0: i32, %arg1: i32, %arg2: i32) -> (i32, i32) {
    %c0_i32 = arith.constant 0 : i32
    return %arg0, %arg1 : i32, i32
  }
}

</mosaic_0001>

<llo_original>
// kernel: linear_forward.1
$region0: #{linear_forward.1}
  #allocation0 [shape = 'u32[]', space=smem, size = 0x4, offset = 0x4, fixed_abs, tag = 'smem constant byte address 0x4 - core index']
  #allocation1 [shape = 'u32[144,128]{1,0:T(1,128)}', space=vmem, size = 0x12000, scoped, tag = 'internal scratch']
  #allocation2 [shape = 'f32[8,16]{1,0:T(8,128)}', space=vmem, size = 0x1000, scoped, tag = 'scratch operand']
  %s0 = inlined_call_operand.vmem [shape: f32[8,32], index: 0, kind: input, shape index: {}]
  %s1 = inlined_call_operand.vmem [shape: f32[32,16], index: 1, kind: input, shape index: {}]
  %s2 = inlined_call_operand.vmem [shape: f32[1,16], index: 2, kind: input, shape index: {}]
  %s3 = inlined_call_operand.hbm [shape: f32[8,16], index: 3, kind: output, shape index: {}]
  %s4 = sld [smem:[#allocation0]]
  $region30: #{linear_forward.1} parent=0
    _
  %s6 = ssub.s32 1, %s4
  %s7 = scalar_select 0, %s6, %s4
  $region1: #{linear_forward.1} parent=0
    #allocation3 [shape = 'u8[4096]{0}', space=vmem, size = 0x1000, scoped, tag = 'output window, operand 0, single buffered']
    #allocation4 [shape = 's32[1]{0}', space=sflag, size = 0x4, scoped, tag = 'scoped memory for linear_forward.1']
    %8 = vsyncpa [#allocation4], 0
    // Predicated region
    $region2: #{linear_forward.1} parent=1 // pred_check
      _
    $region3: #{linear_forward.1} parent=1 // pred_check_branch
      %10 = sbr.rel (0) target = $region5
    $region4: #{linear_forward.1} parent=1 // pred_region
      _
    $region5: #{linear_forward.1} parent=1 // pred_fallthru
      _
    // Predicated region
    $region6: #{linear_forward.1} parent=1 // pred_check
      _
    $region7: #{linear_forward.1} parent=1 // pred_check_branch
      %12 = sbr.rel (0) target = $region9
    $region8: #{linear_forward.1} parent=1 // pred_region
      _
    $region9: #{linear_forward.1} parent=1 // pred_fallthru
      _
    // Predicated region
    $region10: #{linear_forward.1} parent=1 // pred_check
      _
    $region11: #{linear_forward.1} parent=1 // pred_check_branch
      %14 = sbr.rel (0) target = $region13
    $region12: #{linear_forward.1} parent=1 // pred_region
      _
    $region13: #{linear_forward.1} parent=1 // pred_fallthru
      _
    %p15 = scmp.eq.s32.totalorder 0, 0
    // Predicated region
    $region14: #{linear_forward.1} parent=1 // pred_check
      %p16 = pneg %p15
    $region15: #{linear_forward.1} parent=1 // pred_check_branch
      %18 = sbr.rel (%p16) target = $region17
    $region16: #{linear_forward.1} parent=1 // pred_region
      %vm19 = vcmask 130048
      %20 = vst.msk [vmem:[#allocation2] sm:$0xff] %vm19, 0.0
    $region17: #{linear_forward.1} parent=1 // pred_fallthru
      _
    %v21 = vld [vmem:[#allocation2] sm:$0xff]
    %v22 = vld [vmem:[%s0] sm:$0xff]
    %v23 = vld [vmem:[%s1] sm:$0xff]
    %v24 = vld [vmem:[%s1 + $0x8] sm:$0xff]
    %v25 = vld [vmem:[%s1 + $0x10] sm:$0xff]
    %v26 = vld [vmem:[%s1 + $0x18] sm:$0xff]
    %vm27 = vcmask 261120
    %v29 = vsel %vm27, %v22, 0
    %31 = vmatprep.subr.mxu0 0.0
    %32 = vmatpush1.msra.mxu0 %v23
    %33 = vmatprep.subr.mxu0 0.0
    %34 = vmatpush1.msra.mxu0 %v24
    %35 = vmatprep.subr.mxu0 0.0
    %36 = vmatpush1.msra.mxu0 %v25
    %37 = vmatprep.subr.mxu0 0.0
    %38 = vmatpush1.msra.mxu0 %v26
    %39 = vmatprep.subr.mxu0 0.0
    %40 = vmatpush1.msra.mxu0 0.0
    %41 = vmatprep.subr.mxu0 0.0
    %42 = vmatpush1.msra.mxu0 0.0
    %43 = vmatprep.subr.mxu0 0.0
    %44 = vmatpush1.msra.mxu0 0.0
    %45 = vmatprep.subr.mxu0 0.0
    %46 = vmatpush1.msra.mxu0 0.0
    %47 = vmatprep.subr.mxu0 0.0
    %48 = vmatpush1.msra.mxu0 0.0
    %49 = vmatprep.subr.mxu0 0.0
    %50 = vmatpush1.msra.mxu0 0.0
    %51 = vmatprep.subr.mxu0 0.0
    %52 = vmatpush1.msra.mxu0 0.0
    %53 = vmatprep.subr.mxu0 0.0
    %54 = vmatpush1.msra.mxu0 0.0
    %55 = vmatprep.subr.mxu0 0.0
    %56 = vmatpush1.msra.mxu0 0.0
    %57 = vmatprep.subr.mxu0 0.0
    %58 = vmatpush1.msra.mxu0 0.0
    %59 = vmatprep.subr.mxu0 0.0
    %60 = vmatpush1.msra.mxu0 0.0
    %61 = vmatprep.subr.mxu0 0.0
    %62 = vmatpush1.msra.mxu0 0.0
    %63 = vmatprep.subr.mxu0 0.0
    %64 = vmatpush1.msra.mxu0 0.0
    %65 = vmatprep.subr.mxu0 0.0
    %66 = vmatpush1.msra.mxu0 0.0
    %67 = vmatprep.subr.mxu0 0.0
    %68 = vmatpush1.msra.mxu0 0.0
    %69 = vmatprep.subr.mxu0 0.0
    %70 = vmatpush1.msra.mxu0 0.0
    %71 = vmatprep.subr.mxu0 0.0
    %72 = vmatpush1.msra.mxu0 0.0
    %73 = vmatprep.subr.mxu0 0.0
    %74 = vmatpush1.msra.mxu0 0.0
    %75 = vmatprep.subr.mxu0 0.0
    %76 = vmatpush1.msra.mxu0 0.0
    %77 = vmatprep.subr.mxu0 0.0
    %78 = vmatpush1.msra.mxu0 0.0
    %79 = vmatprep.subr.mxu0 0.0
    %80 = vmatpush1.msra.mxu0 0.0
    %81 = vmatprep.subr.mxu0 0.0
    %82 = vmatpush1.msra.mxu0 0.0
    %83 = vmatprep.subr.mxu0 0.0
    %84 = vmatpush1.msra.mxu0 0.0
    %85 = vmatprep.subr.mxu0 0.0
    %86 = vmatpush1.msra.mxu0 0.0
    %87 = vmatprep.subr.mxu0 0.0
    %88 = vmatpush1.msra.mxu0 0.0
    %89 = vmatprep.subr.mxu0 0.0
    %90 = vmatpush1.msra.mxu0 0.0
    %91 = vmatprep.subr.mxu0 0.0
    %92 = vmatpush1.msra.mxu0 0.0
    %93 = vmatprep.subr.mxu0 0.0
    %94 = vmatpush1.msra.mxu0 0.0
    %95 = vmatprep.mubr.f32.mxu0 0.0
    %96 = vmatmul.mubr.f32.gmra.mrb[0].mxu0 %v29
    %v97 = vpop.f32.mrb[0].mxu0
    %v98 = vadd.f32 0.0, %v97
    %v99 = vpop.f32.mrb[0].mxu0
    %100 = vdwg.mxu0
    %v101 = vadd.f32 %v21, %v98
    %vm102 = vcmask 130048
    %103 = vst.msk [vmem:[#allocation2] sm:$0xff] %vm102, %v101
    // Predicated region
    $region18: #{linear_forward.1} parent=1 // pred_check
      %p104 = pneg %p15
    $region19: #{linear_forward.1} parent=1 // pred_check_branch
      %106 = sbr.rel (%p104) target = $region21
    $region20: #{linear_forward.1} parent=1 // pred_region
      %v107 = vld [vmem:[#allocation2] sm:$0xff]
      %v108 = vld [vmem:[%s2] sm:$0x1]
      %v110 = vlaneseq
      %v111 = vshrl.u32 %v110, 7
      %v112 = vsub.s32 0, %v111
      %v113 = vrot.slane %v108, %v112
      %v115 = vadd.f32 %v107, %v113
      %116 = vst.msk [vmem:[#allocation3] sm:$0xff] %vm102, %v115
    $region21: #{linear_forward.1} parent=1 // pred_fallthru
      _
    // Predicated region
    $region22: #{linear_forward.1} parent=1 // pred_check
      _
    $region23: #{linear_forward.1} parent=1 // pred_check_branch
      %118 = sbr.rel (0) target = $region25
    $region24: #{linear_forward.1} parent=1 // pred_region
      %s120 = ssub.s32 128, 128
      %121 = vsyncadd [#allocation4], %s120
      %s123 = sshll.u32 [#allocation3], 4
      %s124 = int_to_ptr.vmem [resolvable:$true] %s123
      %126 = dma.vmem_to_hbm [thread:$0]  %s124, 128, %s3, [#allocation4]
    $region25: #{linear_forward.1} parent=1 // pred_fallthru
      _
    // Predicated region
    $region26: #{linear_forward.1} parent=1 // pred_check
      _
    $region27: #{linear_forward.1} parent=1 // pred_check_branch
      %128 = sbr.rel (0) target = $region29
    $region28: #{linear_forward.1} parent=1 // pred_region
      %129 = dma.done [#allocation4], 128
    $region29: #{linear_forward.1} parent=1 // pred_fallthru
      _
    %130 = vsyncpa [#allocation4], 1

</llo_original>
